<compile_context>
chip_gen: v7x
topology: tpu7x:2x2x1
jax: 0.10.0
libtpu: 0.0.40
codegen_flags: <defaults>
</compile_context>

<pallas_src>
import functools

import jax
import jax.numpy as jnp
from jax.experimental import pallas as pl
from jax.experimental.pallas import tpu as pltpu


def get_padding(k, d):
    return d * (k - 1) // 2


@functools.lru_cache(maxsize=None)
def _pltpu_roll_matches_jnp_roll():
    """One-time eager probe of pltpu.roll's rotation convention.

    Returns True iff pltpu.roll(x, s, axis) == jnp.roll(x, s, axis) (elements
    move toward higher indices).  Keeps the tap-shift sign below robust to the
    primitive's convention.  Must be called outside jit (it is, in this file).
    """
    def probe(x_ref, o_ref):
        o_ref[...] = pltpu.roll(x_ref[...], 1, 1)

    x = jnp.tile(jnp.arange(128, dtype=jnp.float32), (8, 1))      # (8, 128)
    y = pl.pallas_call(
        probe, out_shape=jax.ShapeDtypeStruct((8, 128), jnp.float32))(x)
    return bool(y[0, 1] == 0.0)   # jnp.roll: result[..., 1] == x[..., 0]


def make_resblock_kernel(d_ri, kernel_size, C, N, T, roll_like_jnp):
    flat_dils = [d for blk in d_ri for d in blk]
    block_lens = [len(blk) for blk in d_ri]
    K = kernel_size
    NT = N * T

    def resblock_kernel(x_ref, w_ref, b_ref, out_ref, stacked_ref):
        x = x_ref[...]                               # (C, N*T) f32
        a_x = jnp.where(x > 0, x, 0.1 * x)           # LeakyReLU(x); reused by every block head
        # Within-segment time index of every lane (layer-invariant; hoisted).
        lane_t = jax.lax.broadcasted_iota(jnp.int32, (C, NT), 1) % T

        acc = x                                      # residual term: output += x
        layer = 0
        for blen in block_lens:                      # one dri_block (nn.Sequential)
            h = x
            for li in range(blen):                   # LeakyReLU -> dilated Conv1d
                d = flat_dils[layer]
                p = get_padding(K, d)
                a = a_x if li == 0 else jnp.where(h > 0, h, 0.1 * h)

                # Build the stacked-tap RHS directly in the persistent bf16
                # scratch: rows [k*C:(k+1)*C] hold tap k, i.e. a[:, t + k*d - p],
                # with lanes whose source falls outside the own batch segment
                # ("same" zero padding / segment boundary) masked to 0.
                for k in range(K):
                    off = k * d - p                  # static per-tap time offset
                    if off == 0:
                        tap = a
                    else:
                        shift = ((-off) if roll_like_jnp else off) % NT
                        rolled = pltpu.roll(a, shift, 1)           # XLU lane rotate
                        valid = (lane_t >= -off) & (lane_t < T - off)
                        tap = jnp.where(valid, rolled, 0.0)
                    stacked_ref[k * C:(k + 1) * C, :] = tap.astype(jnp.bfloat16)

                # One deep-contraction bf16 MXU matmul (f32 accumulation); bias
                # is a broadcast VALU add.
                # TODO(synk): on v7x the MRB allows K per-tap (C,C)x(C,NT)
                # matmuls to accumulate in place (skipping the stacked RHS);
                # keep the single stacked matmul on v5e/v6e (MRF).
                h = jnp.dot(w_ref[layer], stacked_ref[...],
                            preferred_element_type=jnp.float32) + b_ref[layer]
                layer += 1
            acc = acc + h
        out_ref[...] = acc

    return resblock_kernel


def resblock_forward(x, weights, biases, d_ri, kernel_size):
    """x: (N, C, T) f32; weights[i]: (C_out, C_in, K) weight-norm-effective; biases[i]: (C_out,)."""
    N, C, T = x.shape
    K = kernel_size
    L = sum(len(blk) for blk in d_ri)

    assert C % 8 == 0 and T % 128 == 0, "layout assumes sublane/lane-aligned C, T"
    assert C % 16 == 0, "bf16 stacked-slab row offsets (k*C) must be (16,128)-tile aligned"

    # Pack all layer weights into ONE bf16 operand (L, C_out, K*C_in), column
    # order [tap k=0 (C_in), ..., tap K-1 (C_in)] to match the stacked RHS.
    w_all = jnp.stack(
        [jnp.transpose(w, (0, 2, 1)).reshape(C, K * C) for w in weights], axis=0
    ).astype(jnp.bfloat16)                                     # (L, C, K*C)
    b_all = jnp.stack(biases, axis=0).reshape(L, C, 1)         # f32, post-matmul add

    # Pack the batch into the lane axis: (N, C, T) -> (C, N*T).
    x2d = jnp.transpose(x, (1, 0, 2)).reshape(C, N * T)

    kern = make_resblock_kernel(d_ri, K, C, N, T, _pltpu_roll_matches_jnp_roll())

    out2d = pl.pallas_call(
        kern,
        out_shape=jax.ShapeDtypeStruct((C, N * T), jnp.float32),
        grid_spec=pltpu.PrefetchScalarGridSpec(
            num_scalar_prefetch=0,
            grid=(1,),
            in_specs=[pl.BlockSpec((C, N * T), lambda i: (0, 0)),
                      pl.BlockSpec((L, C, K * C), lambda i: (0, 0, 0)),
                      pl.BlockSpec((L, C, 1), lambda i: (0, 0, 0))],
            out_specs=pl.BlockSpec((C, N * T), lambda i: (0, 0)),
            scratch_shapes=[pltpu.VMEM((K * C, N * T), jnp.bfloat16)],
        ),
        compiler_params=pltpu.CompilerParams(
            dimension_semantics=("arbitrary",)),
    )(x2d, w_all, b_all)

    return jnp.transpose(out2d.reshape(C, N, T), (1, 0, 2))


def ref_forward(x, weights, biases, d_ri, kernel_size):
    """Pure-JAX reference mirroring the PyTorch forward (f32, highest precision)."""
    out = jnp.zeros_like(x)
    idx = 0
    for blk in d_ri:
        h = x
        for d in blk:
            p = get_padding(kernel_size, d)
            a = jnp.where(h > 0, h, 0.1 * h)
            y = jax.lax.conv_general_dilated(
                a, weights[idx], window_strides=(1,), padding=[(p, p)],
                rhs_dilation=(d,),
                dimension_numbers=("NCH", "OIH", "NCH"),
                precision=jax.lax.Precision.HIGHEST)
            h = y + biases[idx].reshape(1, -1, 1)
            idx += 1
        out = out + h
    return out + x


if __name__ == "__main__":
    # Module hyper-params (small, consistent with ResBlock(hid, kernel, d_ri))
    hid = 32          # channels
    kernel_size = 3   # Conv1d kernel
    d_ri = [[1, 3], [5]]
    N, T = 2, 128     # batch, sequence length

    key = jax.random.PRNGKey(0)
    n_layers = sum(len(b) for b in d_ri)
    keys = iter(jax.random.split(key, 3 * n_layers + 1))

    # Deterministic parameter init.  weight_norm: W = g * v / ||v||, norm over
    # (in_channels, kernel) per output channel; effective W computed here.
    weights, biases = [], []
    for blk in d_ri:
        for _d in blk:
            v = jax.random.normal(next(keys), (hid, hid, kernel_size),
                                  jnp.float32) * 0.1
            g = jax.random.uniform(next(keys), (hid, 1, 1), jnp.float32,
                                   0.5, 1.5)
            norm = jnp.sqrt(jnp.sum(v * v, axis=(1, 2), keepdims=True))
            weights.append(g * v / norm)                       # (O, I, K)
            biases.append(jax.random.normal(next(keys), (hid,),
                                            jnp.float32) * 0.1)

    x = jax.random.normal(next(keys), (N, hid, T), jnp.float32)

    out = resblock_forward(x, weights, biases, d_ri, kernel_size)
    out = jax.block_until_ready(out)

    ref = ref_forward(x, weights, biases, d_ri, kernel_size)
    assert out.shape == (N, hid, T)
    err = float(jnp.max(jnp.abs(out - ref)))
    # bf16 matmul operands (f32 accumulation) vs an all-f32 reference.
    assert jnp.allclose(out, ref, atol=2e-2, rtol=2e-2), err

    print("KERNEL_OK")
</pallas_src>

<mosaic_0001>
module attributes {stable_mosaic.version = 11 : i64} {
  func.func @probe(%arg0: memref<8x128xf32, #tpu.memory_space<vmem>>, %arg1: memref<8x128xf32, #tpu.memory_space<vmem>>) attributes {dimension_semantics = [], scalar_prefetch = 0 : i64, scratch_operands = 0 : i64, tpu.core_type = #tpu.core_type<tc>} {
    %c0 = arith.constant 0 : index
    %c0_0 = arith.constant 0 : index
    %0 = vector.load %arg0[%c0, %c0_0] : memref<8x128xf32, #tpu.memory_space<vmem>>, vector<8x128xf32>
    %c1_i32 = arith.constant 1 : i32
    %1 = tpu.dynamic_rotate %0 by %c1_i32 dim 1 : vector<8x128xf32>, i32 -> vector<8x128xf32>
    %c0_1 = arith.constant 0 : index
    %c0_2 = arith.constant 0 : index
    %2 = vector.load %arg1[%c0_1, %c0_2] : memref<8x128xf32, #tpu.memory_space<vmem>>, vector<8x128xf32>
    tpu.vector_store %arg1[%c0_1, %c0_2], %1 {strides = array<i32>} : memref<8x128xf32, #tpu.memory_space<vmem>>, vector<8x128xf32>,
    return
  }
}

</mosaic_0001>

<llo_original>
// kernel: tpu_custom_call.1
$region0: #{tpu_custom_call.1}
  #allocation0 [shape = 'u32[]', space=smem, size = 0x4, offset = 0x4, fixed_abs, tag = 'smem constant byte address 0x4 - core index']
  #allocation1 [shape = 'u32[144,128]{1,0:T(1,128)}', space=vmem, size = 0x12000, scoped, tag = 'internal scratch']
  %s0 = inlined_call_operand.hbm [shape: f32[8,128], index: 0, kind: input, shape index: {}]
  %s1 = inlined_call_operand.hbm [shape: f32[8,128], index: 1, kind: output, shape index: {}]
  %s2 = sld [smem:[#allocation0]]
  $region18: #{tpu_custom_call.1} parent=0
    _
  %s4 = ssub.s32 1, %s2
  %s5 = scalar_select 0, %s4, %s2
  $region1: #{tpu_custom_call.1} parent=0
    #allocation2 [shape = 'u8[4096]{0}', space=vmem, size = 0x1000, scoped, tag = 'input window, operand 0, single buffered']
    #allocation3 [shape = 's32[1]{0}', space=sflag, size = 0x4, scoped, tag = 'scoped memory for tpu_custom_call.1']
    #allocation4 [shape = 's32[1]{0}', space=sflag, size = 0x4, scoped, tag = 'scoped memory for tpu_custom_call.1']
    #allocation5 [shape = 'u8[4096]{0}', space=vmem, size = 0x1000, scoped, tag = 'output window, operand 0, single buffered']
    %6 = vsyncpa [#allocation3], 0
    %7 = vsyncpa [#allocation4], 0
    // Predicated region
    $region2: #{tpu_custom_call.1} parent=1 // pred_check
      _
    $region3: #{tpu_custom_call.1} parent=1 // pred_check_branch
      %9 = sbr.rel (0) target = $region5
    $region4: #{tpu_custom_call.1} parent=1 // pred_region
      %s11 = ssub.s32 128, 128
      %12 = vsyncadd [#allocation3], %s11
      %s14 = sshll.u32 [#allocation2], 4
      %s15 = int_to_ptr.vmem [resolvable:$true] %s14
      %17 = dma.hbm_to_vmem [thread:$0]  %s0, 128, %s15, [#allocation3]
    $region5: #{tpu_custom_call.1} parent=1 // pred_fallthru
      _
    // Predicated region
    $region6: #{tpu_custom_call.1} parent=1 // pred_check
      _
    $region7: #{tpu_custom_call.1} parent=1 // pred_check_branch
      %19 = sbr.rel (0) target = $region9
    $region8: #{tpu_custom_call.1} parent=1 // pred_region
      %20 = dma.done [#allocation3], 128
    $region9: #{tpu_custom_call.1} parent=1 // pred_fallthru
      _
    %v21 = vld [vmem:[#allocation2] sm:$0xff]
    %22 = vrot.lane.b32.xlu0 %v21, 1
    %v23 = vpop.permute.xlu0 %22
    %24 = vst [vmem:[#allocation5] sm:$0xff] %v23
    // Predicated region
    $region10: #{tpu_custom_call.1} parent=1 // pred_check
      _
    $region11: #{tpu_custom_call.1} parent=1 // pred_check_branch
      %26 = sbr.rel (0) target = $region13
    $region12: #{tpu_custom_call.1} parent=1 // pred_region
      %s28 = ssub.s32 128, 128
      %29 = vsyncadd [#allocation4], %s28
      %s31 = sshll.u32 [#allocation5], 4
      %s32 = int_to_ptr.vmem [resolvable:$true] %s31
      %34 = dma.vmem_to_hbm [thread:$0]  %s32, 128, %s1, [#allocation4]
    $region13: #{tpu_custom_call.1} parent=1 // pred_fallthru
      _
    // Predicated region
    $region14: #{tpu_custom_call.1} parent=1 // pred_check
      _
    $region15: #{tpu_custom_call.1} parent=1 // pred_check_branch
      %36 = sbr.rel (0) target = $region17
    $region16: #{tpu_custom_call.1} parent=1 // pred_region
      %37 = dma.done [#allocation4], 128
    $region17: #{tpu_custom_call.1} parent=1 // pred_fallthru
      _
    %38 = vsyncpa [#allocation3], 1
    %39 = vsyncpa [#allocation4], 1

</llo_original>
